<compile_context>
chip_gen: v5e
topology: v5e:2x2
jax: 0.10.0
libtpu: 0.0.40
codegen_flags: <defaults>
</compile_context>

<pallas_src>
import functools

import jax
import jax.numpy as jnp
from jax.experimental import pallas as pl
from jax.experimental.pallas import tpu as pltpu

P = 128  # lane-padded feature width used throughout the fused network


def _round_up(n, m):
    return ((n + m - 1) // m) * m


def _make_ppo_kernel(in_rows, output_size):
    """Kernel body: 3 fused matmuls + ReLUs + masked softmax, one [bb, P] store."""

    def kernel(x_ref, w_ref, b_ref, out_ref):
        x = x_ref[...]                                       # [bb, in_rows]

        # layer 1: contract only the live rows of the packed weight slab
        w1 = w_ref[0, :in_rows, :]                           # [in_rows, P]
        h = jnp.dot(x, w1, preferred_element_type=jnp.float32) + b_ref[0]
        h = jnp.maximum(h, 0.0)

        # layer 2 (block-diagonal).  astype is a no-op on the f32 path and
        # re-enters the bf16 MXU path when the weight slab is bf16.
        h = h.astype(w_ref.dtype)
        h = jnp.dot(h, w_ref[1], preferred_element_type=jnp.float32) + b_ref[1]
        h = jnp.maximum(h, 0.0)

        # layer 3 (block-diagonal): lanes [0,out) = logits, lane `out` = value
        h = h.astype(w_ref.dtype)
        raw = jnp.dot(h, w_ref[2], preferred_element_type=jnp.float32) + b_ref[2]

        # masked, numerically-stable softmax over the logit lanes only.
        # Mask once to -inf: exp(-inf) = 0 zeroes the non-logit lanes for free.
        lane = jax.lax.broadcasted_iota(jnp.int32, raw.shape, 1)
        is_logit = lane < output_size
        masked = jnp.where(is_logit, raw, -jnp.inf)
        m = jnp.max(masked, axis=-1, keepdims=True)
        e = jnp.exp(masked - m)                              # 0 on masked lanes
        denom = jnp.sum(e, axis=-1, keepdims=True)
        r = pl.reciprocal(denom, approx=True)                # EUP vrcp
        r = r * (2.0 - denom * r)                            # one Newton step
        probs = e * r

        # lane-dense output slab: probs in [0,out), value in lane `out`, zeros after
        out_ref[...] = jnp.where(is_logit, probs, raw)

    return kernel


def pack_params(p, input_size, hidden_size, output_size):
    """Pack the 12 Linear params into one weight slab [3,P,P] + bias slab [3,1,P]."""
    H = hidden_size
    assert input_size <= P and 2 * H <= P and output_size + 1 <= P

    w = jnp.zeros((3, P, P), jnp.float32)
    b = jnp.zeros((3, 1, P), jnp.float32)

    # layer 1: x @ [aw1 | cw1]
    w = w.at[0, :input_size, :H].set(p["aw1"])
    w = w.at[0, :input_size, H:2 * H].set(p["cw1"])
    b = b.at[0, 0, :H].set(p["ab1"][0])
    b = b.at[0, 0, H:2 * H].set(p["cb1"][0])

    # layer 2: block-diag(aw2, cw2)
    w = w.at[1, :H, :H].set(p["aw2"])
    w = w.at[1, H:2 * H, H:2 * H].set(p["cw2"])
    b = b.at[1, 0, :H].set(p["ab2"][0])
    b = b.at[1, 0, H:2 * H].set(p["cb2"][0])

    # layer 3: actor -> logits lanes [0,out), critic -> value lane `out`
    w = w.at[2, :H, :output_size].set(p["aw3"])
    w = w.at[2, H:2 * H, output_size].set(p["cw3"][:, 0])
    b = b.at[2, 0, :output_size].set(p["ab3"][0])
    b = b.at[2, 0, output_size].set(p["cb3"][0, 0])

    return w, b


@functools.partial(jax.jit, static_argnums=(3, 4, 5, 6))
def ppo_forward(x, w_slab, b_slab, input_size, output_size,
                block_b=2048, use_bf16_mxu=False):
    """x: [B, input_size] f32.  Returns (probs [B, output_size], value [B, 1])."""
    B = x.shape[0]

    # sublane-align the contraction dim (no-op when input_size % 8 == 0)
    Ip = _round_up(input_size, 8)
    if Ip != input_size:
        x = jnp.pad(x, ((0, 0), (0, Ip - input_size)))

    # batch tiling: large blocks amortize per-step overhead, but keep >= 2 grid
    # steps when the batch allows so "parallel" can shard across TensorCores.
    B8 = _round_up(B, 8)
    if B8 >= 16:
        bb = min(_round_up(block_b, 8), _round_up(B8 // 2, 8))
    else:
        bb = B8
    B_pad = _round_up(B, bb)
    grid = (B_pad // bb,)

    if B_pad != B:
        x = jnp.pad(x, ((0, B_pad - B), (0, 0)))   # pads only the narrow input

    if use_bf16_mxu:
        # bf16 MXU operands (v6e/v7x), f32 accumulation + f32 biases/softmax.
        # (For production, pack the bf16 slab once host-side instead.)
        x = x.astype(jnp.bfloat16)
        w_slab = w_slab.astype(jnp.bfloat16)

    out = pl.pallas_call(
        _make_ppo_kernel(Ip, output_size),
        out_shape=jax.ShapeDtypeStruct((B_pad, P), jnp.float32),
        grid_spec=pltpu.PrefetchScalarGridSpec(
            num_scalar_prefetch=0,
            grid=grid,
            in_specs=[
                pl.BlockSpec((bb, Ip), lambda i: (i, 0)),       # activations stream
                pl.BlockSpec((3, P, P), lambda i: (0, 0, 0)),   # weights resident
                pl.BlockSpec((3, 1, P), lambda i: (0, 0, 0)),   # biases resident
            ],
            out_specs=pl.BlockSpec((bb, P), lambda i: (i, 0)),
        ),
        compiler_params=pltpu.CompilerParams(
            dimension_semantics=("parallel",),
        ),
    )(x, w_slab, b_slab)

    probs = out[:B, :output_size]
    value = out[:B, output_size:output_size + 1]
    return probs, value


def init_params(key, input_size, hidden_size, output_size):
    """Deterministic synthetic parameter init (PyTorch nn.Linear-like uniform)."""
    keys = jax.random.split(key, 12)

    def linear(kw, kb, fan_in, fan_out):
        bound = 1.0 / jnp.sqrt(fan_in)
        # stored as [in, out] (transpose of torch's [out, in])
        w = jax.random.uniform(kw, (fan_in, fan_out), jnp.float32, -bound, bound)
        b = jax.random.uniform(kb, (1, fan_out), jnp.float32, -bound, bound)
        return w, b

    aw1, ab1 = linear(keys[0], keys[1], input_size, hidden_size)
    aw2, ab2 = linear(keys[2], keys[3], hidden_size, hidden_size)
    aw3, ab3 = linear(keys[4], keys[5], hidden_size, output_size)
    cw1, cb1 = linear(keys[6], keys[7], input_size, hidden_size)
    cw2, cb2 = linear(keys[8], keys[9], hidden_size, hidden_size)
    cw3, cb3 = linear(keys[10], keys[11], hidden_size, 1)

    return dict(aw1=aw1, ab1=ab1, aw2=aw2, ab2=ab2, aw3=aw3, ab3=ab3,
                cw1=cw1, cb1=cb1, cw2=cw2, cb2=cb2, cw3=cw3, cb3=cb3)


def ppo_forward_ref(x, p):
    """Pure-JAX reference for correctness checking."""
    h = jnp.maximum(x @ p["aw1"] + p["ab1"], 0.0)
    h = jnp.maximum(h @ p["aw2"] + p["ab2"], 0.0)
    logits = h @ p["aw3"] + p["ab3"]
    probs = jax.nn.softmax(logits, axis=-1)
    c = jnp.maximum(x @ p["cw1"] + p["cb1"], 0.0)
    c = jnp.maximum(c @ p["cw2"] + p["cb2"], 0.0)
    value = c @ p["cw3"] + p["cb3"]
    return probs, value


if __name__ == "__main__":
    input_size, hidden_size, output_size = 16, 32, 4
    batch = 8

    key = jax.random.PRNGKey(0)
    kx, kp = jax.random.split(key)
    x = jax.random.normal(kx, (batch, input_size), jnp.float32)
    params = init_params(kp, input_size, hidden_size, output_size)

    # one-time packing of the 13 tensors into two slabs (amortized across calls)
    w_slab, b_slab = pack_params(params, input_size, hidden_size, output_size)

    # small-batch (latency-bound) path: grid = (1,)
    probs, value = ppo_forward(x, w_slab, b_slab, input_size, output_size)
    jax.block_until_ready((probs, value))

    probs_ref, value_ref = ppo_forward_ref(x, params)
    assert jnp.allclose(probs, probs_ref, atol=1e-5, rtol=1e-5)
    assert jnp.allclose(value, value_ref, atol=1e-5, rtol=1e-5)
    assert jnp.allclose(jnp.sum(probs, axis=-1), 1.0, atol=1e-5)

    # large-rollout path: exercises the multi-step "parallel" grid (>= 2 blocks)
    big_x = jax.random.normal(kx, (4096, input_size), jnp.float32)
    bp, bv = ppo_forward(big_x, w_slab, b_slab, input_size, output_size)
    jax.block_until_ready((bp, bv))
    bp_ref, bv_ref = ppo_forward_ref(big_x, params)
    assert jnp.allclose(bp, bp_ref, atol=1e-5, rtol=1e-5)
    assert jnp.allclose(bv, bv_ref, atol=1e-5, rtol=1e-5)

    # optional bf16-operand MXU path (v6e/v7x); f32 softmax keeps probs normalized
    pb, vb = ppo_forward(x, w_slab, b_slab, input_size, output_size, 2048, True)
    jax.block_until_ready((pb, vb))
    assert jnp.all(jnp.isfinite(pb)) and jnp.all(jnp.isfinite(vb))
    assert jnp.allclose(jnp.sum(pb, axis=-1), 1.0, atol=1e-3)

    print("KERNEL_OK")
</pallas_src>

<mosaic_0001>
module attributes {stable_mosaic.version = 11 : i64} {
  func.func @kernel(%arg0: i32, %arg1: memref<8x16xf32, #tpu.memory_space<vmem>>, %arg2: memref<3x128x128xf32, #tpu.memory_space<vmem>>, %arg3: memref<3x1x128xf32, #tpu.memory_space<vmem>>, %arg4: memref<8x128xf32, #tpu.memory_space<vmem>>) attributes {dimension_semantics = [#tpu.dimension_semantics<parallel>], iteration_bounds = array<i64: 1>, scalar_prefetch = 0 : i64, scratch_operands = 0 : i64, tpu.core_type = #tpu.core_type<tc>, window_params = [{transform_indices = @transform_0, window_bounds = array<i64: 8, 16>}, {pipeline_mode = #tpu.pipeline_mode<synchronous>, transform_indices = @transform_1, window_bounds = array<i64: 3, 128, 128>}, {pipeline_mode = #tpu.pipeline_mode<synchronous>, transform_indices = @transform_2, window_bounds = array<i64: 3, 1, 128>}, {transform_indices = @transform_3, window_bounds = array<i64: 8, 128>}]} {
    %c0 = arith.constant 0 : index
    %c0_0 = arith.constant 0 : index
    %0 = vector.load %arg1[%c0, %c0_0] : memref<8x16xf32, #tpu.memory_space<vmem>>, vector<8x16xf32>
    %c0_1 = arith.constant 0 : index
    %c0_2 = arith.constant 0 : index
    %c0_3 = arith.constant 0 : index
    %1 = vector.load %arg2[%c0_1, %c0_2, %c0_3] : memref<3x128x128xf32, #tpu.memory_space<vmem>>, vector<1x16x128xf32>
    %2 = vector.shape_cast %1 : vector<1x16x128xf32> to vector<16x128xf32>
    %cst = arith.constant dense<0.000000e+00> : vector<8x128xf32>
    %3 = tpu.matmul %0, %2, %cst {dimension_numbers = #tpu.dot_dimension_numbers<[1], [0], [0], [1], [0, 0, 1, 1], [], []>} : vector<8x16xf32>, vector<16x128xf32>, vector<8x128xf32> -> vector<8x128xf32>
    %c0_4 = arith.constant 0 : index
    %c0_5 = arith.constant 0 : index
    %c0_6 = arith.constant 0 : index
    %4 = vector.load %arg3[%c0_4, %c0_5, %c0_6] : memref<3x1x128xf32, #tpu.memory_space<vmem>>, vector<1x1x128xf32>
    %5 = vector.shape_cast %4 : vector<1x1x128xf32> to vector<1x128xf32>
    %6 = vector.broadcast %5 : vector<1x128xf32> to vector<8x128xf32>
    %7 = arith.addf %3, %6 : vector<8x128xf32>
    %cst_7 = arith.constant 0.000000e+00 : f32
    %8 = vector.broadcast %cst_7 : f32 to vector<8x128xf32>
    %9 = arith.maximumf %7, %8 : vector<8x128xf32>
    %c1 = arith.constant 1 : index
    %c0_8 = arith.constant 0 : index
    %c0_9 = arith.constant 0 : index
    %10 = vector.load %arg2[%c1, %c0_8, %c0_9] : memref<3x128x128xf32, #tpu.memory_space<vmem>>, vector<1x128x128xf32>
    %11 = vector.shape_cast %10 : vector<1x128x128xf32> to vector<128x128xf32>
    %cst_10 = arith.constant dense<0.000000e+00> : vector<8x128xf32>
    %12 = tpu.matmul %9, %11, %cst_10 {dimension_numbers = #tpu.dot_dimension_numbers<[1], [0], [0], [1], [0, 0, 1, 1], [], []>} : vector<8x128xf32>, vector<128x128xf32>, vector<8x128xf32> -> vector<8x128xf32>
    %c1_11 = arith.constant 1 : index
    %c0_12 = arith.constant 0 : index
    %c0_13 = arith.constant 0 : index
    %13 = vector.load %arg3[%c1_11, %c0_12, %c0_13] : memref<3x1x128xf32, #tpu.memory_space<vmem>>, vector<1x1x128xf32>
    %14 = vector.shape_cast %13 : vector<1x1x128xf32> to vector<1x128xf32>
    %15 = vector.broadcast %14 : vector<1x128xf32> to vector<8x128xf32>
    %16 = arith.addf %12, %15 : vector<8x128xf32>
    %cst_14 = arith.constant 0.000000e+00 : f32
    %17 = vector.broadcast %cst_14 : f32 to vector<8x128xf32>
    %18 = arith.maximumf %16, %17 : vector<8x128xf32>
    %c2 = arith.constant 2 : index
    %c0_15 = arith.constant 0 : index
    %c0_16 = arith.constant 0 : index
    %19 = vector.load %arg2[%c2, %c0_15, %c0_16] : memref<3x128x128xf32, #tpu.memory_space<vmem>>, vector<1x128x128xf32>
    %20 = vector.shape_cast %19 : vector<1x128x128xf32> to vector<128x128xf32>
    %cst_17 = arith.constant dense<0.000000e+00> : vector<8x128xf32>
    %21 = tpu.matmul %18, %20, %cst_17 {dimension_numbers = #tpu.dot_dimension_numbers<[1], [0], [0], [1], [0, 0, 1, 1], [], []>} : vector<8x128xf32>, vector<128x128xf32>, vector<8x128xf32> -> vector<8x128xf32>
    %c2_18 = arith.constant 2 : index
    %c0_19 = arith.constant 0 : index
    %c0_20 = arith.constant 0 : index
    %22 = vector.load %arg3[%c2_18, %c0_19, %c0_20] : memref<3x1x128xf32, #tpu.memory_space<vmem>>, vector<1x1x128xf32>
    %23 = vector.shape_cast %22 : vector<1x1x128xf32> to vector<1x128xf32>
    %24 = vector.broadcast %23 : vector<1x128xf32> to vector<8x128xf32>
    %25 = arith.addf %21, %24 : vector<8x128xf32>
    %26 = tpu.iota {dimensions = array<i32: 1>} : vector<8x128xi32>
    %c4_i32 = arith.constant 4 : i32
    %27 = vector.broadcast %c4_i32 : i32 to vector<8x128xi32>
    %28 = arith.cmpi slt, %26, %27 : vector<8x128xi32>
    %cst_21 = arith.constant 0xFF800000 : f32
    %29 = vector.broadcast %cst_21 : f32 to vector<8x128xf32>
    %30 = arith.select %28, %25, %29 : vector<8x128xi1>, vector<8x128xf32>
    %cst_22 = arith.constant dense<0xFF800000> : vector<8xf32>
    %31 = vector.multi_reduction <maximumf>, %30, %cst_22 [1] : vector<8x128xf32> to vector<8xf32>
    %32 = vector.shape_cast %31 : vector<8xf32> to vector<8x1xf32>
    %33 = vector.broadcast %32 : vector<8x1xf32> to vector<8x128xf32>
    %34 = arith.subf %30, %33 : vector<8x128xf32>
    %35 = math.exp %34 : vector<8x128xf32>
    %cst_23 = arith.constant dense<0.000000e+00> : vector<8xf32>
    %36 = vector.multi_reduction <add>, %35, %cst_23 [1] : vector<8x128xf32> to vector<8xf32>
    %37 = vector.shape_cast %36 : vector<8xf32> to vector<8x1xf32>
    %38 = tpu.reciprocal %37 {approx = true} : vector<8x1xf32> -> vector<8x1xf32>
    %39 = arith.mulf %37, %38 : vector<8x1xf32>
    %cst_24 = arith.constant 2.000000e+00 : f32
    %40 = vector.broadcast %cst_24 : f32 to vector<8x1xf32>
    %41 = arith.subf %40, %39 : vector<8x1xf32>
    %42 = arith.mulf %38, %41 : vector<8x1xf32>
    %43 = vector.broadcast %42 : vector<8x1xf32> to vector<8x128xf32>
    %44 = arith.mulf %35, %43 : vector<8x128xf32>
    %45 = arith.select %28, %44, %25 : vector<8x128xi1>, vector<8x128xf32>
    %c0_25 = arith.constant 0 : index
    %c0_26 = arith.constant 0 : index
    %46 = vector.load %arg4[%c0_25, %c0_26] : memref<8x128xf32, #tpu.memory_space<vmem>>, vector<8x128xf32>
    tpu.vector_store %arg4[%c0_25, %c0_26], %45 {strides = array<i32>} : memref<8x128xf32, #tpu.memory_space<vmem>>, vector<8x128xf32>,
    return
  }
  func.func @transform_0(%arg0: i32) -> (i32, i32) {
    %c0_i32 = arith.constant 0 : i32
    %c0_i32_0 = arith.constant 0 : i32
    return %arg0, %c0_i32 : i32, i32
  }
  func.func @transform_1(%arg0: i32) -> (i32, i32, i32) {
    %c0_i32 = arith.constant 0 : i32
    %c0_i32_0 = arith.constant 0 : i32
    %c0_i32_1 = arith.constant 0 : i32
    %c0_i32_2 = arith.constant 0 : i32
    return %c0_i32, %c0_i32_0, %c0_i32_1 : i32, i32, i32
  }
  func.func @transform_2(%arg0: i32) -> (i32, i32, i32) {
    %c0_i32 = arith.constant 0 : i32
    %c0_i32_0 = arith.constant 0 : i32
    %c0_i32_1 = arith.constant 0 : i32
    %c0_i32_2 = arith.constant 0 : i32
    return %c0_i32, %c0_i32_0, %c0_i32_1 : i32, i32, i32
  }
  func.func @transform_3(%arg0: i32) -> (i32, i32) {
    %c0_i32 = arith.constant 0 : i32
    %c0_i32_0 = arith.constant 0 : i32
    return %arg0, %c0_i32 : i32, i32
  }
}

</mosaic_0001>

<llo_original>
// kernel: ppo_forward.1
$region0: #{ppo_forward.1}
  #allocation0 [shape = 'u32[]', space=smem, size = 0x4, offset = 0x4, fixed_abs, tag = 'smem constant byte address 0x4 - core index']
  #allocation1 [shape = 'u32[72,128]{1,0:T(1,128)}', space=vmem, size = 0x9000, scoped, tag = 'internal scratch']
  %s0 = inlined_call_operand.hbm [shape: f32[8,16], index: 0, kind: input, shape index: {}]
  %s1 = inlined_call_operand.hbm [shape: f32[3,128,128], index: 1, kind: input, shape index: {}]
  %s2 = inlined_call_operand.hbm [shape: f32[3,1,128], index: 2, kind: input, shape index: {}]
  %s3 = inlined_call_operand.vmem [shape: f32[8,128], index: 3, kind: output, shape index: {}]
  %s4 = sld [smem:[#allocation0]]
  $region34: #{ppo_forward.1} parent=0
    _
  %s6 = ssub.s32 1, %s4
  %s7 = scalar_select 0, %s6, %s4
  $region1: #{ppo_forward.1} parent=0
    #allocation2 [shape = 'u8[4096]{0}', space=vmem, size = 0x1000, scoped, tag = 'input window, operand 0, single buffered']
    #allocation3 [shape = 's32[1]{0}', space=sflag, size = 0x4, scoped, tag = 'scoped memory for ppo_forward.1']
    #allocation4 [shape = 'u8[196608]{0}', space=vmem, size = 0x30000, scoped, tag = 'input window, operand 1, single buffered']
    #allocation5 [shape = 's32[1]{0}', space=sflag, size = 0x4, scoped, tag = 'scoped memory for ppo_forward.1']
    #allocation6 [shape = 'u8[1536]{0}', space=vmem, size = 0x800, scoped, tag = 'input window, operand 2, single buffered']
    %8 = vsyncpa [#allocation3], 0
    %9 = vsyncpa [#allocation5], 0
    // Predicated region
    $region2: #{ppo_forward.1} parent=1 // pred_check
      _
    $region3: #{ppo_forward.1} parent=1 // pred_check_branch
      %11 = sbr.rel (0) target = $region5
    $region4: #{ppo_forward.1} parent=1 // pred_region
      %13 = vsyncadd [#allocation3], 0
      %s15 = sshll.u32 %s0, 4
      %s16 = int_to_ptr.hbm [resolvable:$true] %s15
      %s17 = sshll.u32 [#allocation2], 4
      %s18 = int_to_ptr.vmem [resolvable:$true] %s17
      %20 = dma.hbm_to_vmem [thread:$0]  %s16, 128, %s18, [#allocation3]
    $region5: #{ppo_forward.1} parent=1 // pred_fallthru
      _
    // Predicated region
    $region6: #{ppo_forward.1} parent=1 // pred_check
      _
    $region7: #{ppo_forward.1} parent=1 // pred_check_branch
      %22 = sbr.rel (0) target = $region9
    $region8: #{ppo_forward.1} parent=1 // pred_region
      %24 = vsyncadd [#allocation5], 0
      %s25 = sshll.u32 %s1, 4
      %s26 = int_to_ptr.hbm [resolvable:$true] %s25
      %s27 = sshll.u32 [#allocation4], 4
      %s28 = int_to_ptr.vmem [resolvable:$true] %s27
      %33 = dma.hbm_to_vmem [thread:$0]  %s26, 6144, %s28, [#allocation5], 128, 128, 8
    $region9: #{ppo_forward.1} parent=1 // pred_fallthru
      _
    // Predicated region
    $region10: #{ppo_forward.1} parent=1 // pred_check
      _
    $region11: #{ppo_forward.1} parent=1 // pred_check_branch
      %35 = sbr.rel (0) target = $region13
    $region12: #{ppo_forward.1} parent=1 // pred_region
      %37 = vsyncadd [#allocation5], 0
      %s38 = sshll.u32 %s2, 4
      %s39 = int_to_ptr.hbm [resolvable:$true] %s38
      %s40 = sshll.u32 [#allocation6], 4
      %s41 = int_to_ptr.vmem [resolvable:$true] %s40
      %46 = dma.hbm_to_vmem [thread:$0]  %s39, 48, %s41, [#allocation5], 16, 16, 1
    $region13: #{ppo_forward.1} parent=1 // pred_fallthru
      _
    // Predicated region
    $region14: #{ppo_forward.1} parent=1 // pred_check
      _
    $region15: #{ppo_forward.1} parent=1 // pred_check_branch
      %48 = sbr.rel (0) target = $region17
    $region16: #{ppo_forward.1} parent=1 // pred_region
      %50 = dma.done [#allocation3], 128
    $region17: #{ppo_forward.1} parent=1 // pred_fallthru
      _
    // Predicated region
    $region18: #{ppo_forward.1} parent=1 // pred_check
      _
    $region19: #{ppo_forward.1} parent=1 // pred_check_branch
      %52 = sbr.rel (0) target = $region21
    $region20: #{ppo_forward.1} parent=1 // pred_region
      %54 = dma.done [#allocation5], 6144
    $region21: #{ppo_forward.1} parent=1 // pred_fallthru
      _
    // Predicated region
    $region22: #{ppo_forward.1} parent=1 // pred_check
      _
    $region23: #{ppo_forward.1} parent=1 // pred_check_branch
      %56 = sbr.rel (0) target = $region25
    $region24: #{ppo_forward.1} parent=1 // pred_region
      %58 = dma.done [#allocation5], 48
    $region25: #{ppo_forward.1} parent=1 // pred_fallthru
      _
    %v59 = vld [vmem:[#allocation2] sm:$0xff]
    %v60 = vld [vmem:[#allocation4] sm:$0xff]
    %v61 = vld [vmem:[#allocation4 + $0x8] sm:$0xff]
    %v62 = vld [vmem:[#allocation6] sm:$0x1]
    %v64 = vperm.slane %v62, 0
    %vm66 = vcmask 130048
    %v68 = vsel %vm66, %v59, 0
    %70 = vmatpush.msra.mxu0 0.0
    %71 = vmatpush.msra.mxu0 0.0
    %72 = vmatpush.msra.mxu0 0.0
    %73 = vmatpush.msra.mxu0 0.0
    %74 = vmatpush.msra.mxu0 0.0
    %75 = vmatpush.msra.mxu0 0.0
    %76 = vmatpush.msra.mxu0 0.0
    %77 = vmatpush.msra.mxu0 0.0
    %78 = vmatpush.msra.mxu0 0.0
    %79 = vmatpush.msra.mxu0 0.0
    %80 = vmatpush.msra.mxu0 0.0
    %81 = vmatpush.msra.mxu0 0.0
    %82 = vmatpush.msra.mxu0 0.0
    %83 = vmatpush.msra.mxu0 0.0
    %84 = vmatpush.msra.mxu0 %v61
    %85 = vmatpush.msra.mxu0 %v60
    %86 = vmatmul.f32.gmra.mxu0 %v68
    %v87 = vpop.f32.mrf.mxu0
    %v88 = vadd.f32 %v64, %v87
    %89 = vdwg.mxu0
    %v90 = vmax.f32 %v88, 0.0
    %s91 = scalar_lea.vmem [#allocation4], 128
    %v92 = vld [vmem:[%s91] sm:$0xff]
    %v93 = vld [vmem:[%s91 + $0x8] sm:$0xff]
    %v94 = vld [vmem:[%s91 + $0x10] sm:$0xff]
    %v95 = vld [vmem:[%s91 + $0x18] sm:$0xff]
    %v96 = vld [vmem:[%s91 + $0x20] sm:$0xff]
    %v97 = vld [vmem:[%s91 + $0x28] sm:$0xff]
    %v98 = vld [vmem:[%s91 + $0x30] sm:$0xff]
    %v99 = vld [vmem:[%s91 + $0x38] sm:$0xff]
    %v100 = vld [vmem:[%s91 + $0x40] sm:$0xff]
    %v101 = vld [vmem:[%s91 + $0x48] sm:$0xff]
    %v102 = vld [vmem:[%s91 + $0x50] sm:$0xff]
    %v103 = vld [vmem:[%s91 + $0x58] sm:$0xff]
    %v104 = vld [vmem:[%s91 + $0x60] sm:$0xff]
    %v105 = vld [vmem:[%s91 + $0x68] sm:$0xff]
    %v106 = vld [vmem:[%s91 + $0x70] sm:$0xff]
    %v107 = vld [vmem:[%s91 + $0x78] sm:$0xff]
    %s108 = scalar_lea.vmem [#allocation6], 1
    %v109 = vld [vmem:[%s108] sm:$0x1]
    %v111 = vperm.slane %v109, 0
    %113 = vmatpush.msra.mxu0 %v107
    %114 = vmatpush.msra.mxu0 %v106
    %115 = vmatpush.msra.mxu0 %v105
    %116 = vmatpush.msra.mxu0 %v104
    %117 = vmatpush.msra.mxu0 %v103
    %118 = vmatpush.msra.mxu0 %v102
    %119 = vmatpush.msra.mxu0 %v101
    %120 = vmatpush.msra.mxu0 %v100
    %121 = vmatpush.msra.mxu0 %v99
    %122 = vmatpush.msra.mxu0 %v98
    %123 = vmatpush.msra.mxu0 %v97
    %124 = vmatpush.msra.mxu0 %v96
    %125 = vmatpush.msra.mxu0 %v95
    %126 = vmatpush.msra.mxu0 %v94
    %127 = vmatpush.msra.mxu0 %v93
    %128 = vmatpush.msra.mxu0 %v92
    %129 = vmatmul.f32.gmra.mxu0 %v90
    %v130 = vpop.f32.mrf.mxu0
    %v131 = vadd.f32 %v111, %v130
    %132 = vdwg.mxu0
    %v133 = vmax.f32 %v131, 0.0
    %s134 = scalar_lea.vmem [#allocation4], 256
    %v135 = vld [vmem:[%s134] sm:$0xff]
    %v136 = vld [vmem:[%s134 + $0x8] sm:$0xff]
    %v137 = vld [vmem:[%s134 + $0x10] sm:$0xff]
    %v138 = vld [vmem:[%s134 + $0x18] sm:$0xff]
    %v139 = vld [vmem:[%s134 + $0x20] sm:$0xff]
    %v140 = vld [vmem:[%s134 + $0x28] sm:$0xff]
    %v141 = vld [vmem:[%s134 + $0x30] sm:$0xff]
    %v142 = vld [vmem:[%s134 + $0x38] sm:$0xff]
    %v143 = vld [vmem:[%s134 + $0x40] sm:$0xff]
    %v144 = vld [vmem:[%s134 + $0x48] sm:$0xff]
    %v145 = vld [vmem:[%s134 + $0x50] sm:$0xff]
    %v146 = vld [vmem:[%s134 + $0x58] sm:$0xff]
    %v147 = vld [vmem:[%s134 + $0x60] sm:$0xff]
    %v148 = vld [vmem:[%s134 + $0x68] sm:$0xff]
    %v149 = vld [vmem:[%s134 + $0x70] sm:$0xff]
    %v150 = vld [vmem:[%s134 + $0x78] sm:$0xff]
    %s151 = scalar_lea.vmem [#allocation6], 2
    %v152 = vld [vmem:[%s151] sm:$0x1]
    %v154 = vperm.slane %v152, 0
    %156 = vmatpush.msra.mxu0 %v150
    %157 = vmatpush.msra.mxu0 %v149
    %158 = vmatpush.msra.mxu0 %v148
    %159 = vmatpush.msra.mxu0 %v147
    %160 = vmatpush.msra.mxu0 %v146
    %161 = vmatpush.msra.mxu0 %v145
    %162 = vmatpush.msra.mxu0 %v144
    %163 = vmatpush.msra.mxu0 %v143
    %164 = vmatpush.msra.mxu0 %v142
    %165 = vmatpush.msra.mxu0 %v141
    %166 = vmatpush.msra.mxu0 %v140
    %167 = vmatpush.msra.mxu0 %v139
    %168 = vmatpush.msra.mxu0 %v138
    %169 = vmatpush.msra.mxu0 %v137
    %170 = vmatpush.msra.mxu0 %v136
    %171 = vmatpush.msra.mxu0 %v135
    %172 = vmatmul.f32.gmra.mxu0 %v133
    %v173 = vpop.f32.mrf.mxu0
    %v174 = vadd.f32 %v154, %v173
    %175 = vdwg.mxu0
    %v176 = vlaneseq
    %v177 = vand.u32 %v176, 127
    %vm178 = vcmp.lt.s32.totalorder %v177, 4
    %v179 = vsel %vm178, %v174, -inf
    %180 = vmax.xlane.f32.xlu0 %v179
    %v181 = vpop.xlane.xlu0 %180
    %v182 = vsub.f32 %v179, %v181
    %v183 = vmul.f32 %v182, 1.442695
    %v184 = vpow.pop %v183
    %185 = vadd.xlane.f32.xlu0 %v184
    %v186 = vpop.xlane.xlu0 %185
    %v187 = vrcp.pop %v186
    %v188 = vmul.f32 %v186, %v187
    %v189 = vsub.f32 2.0, %v188
    %v190 = vmul.f32 %v187, %v189
    %v191 = vmul.f32 %v184, %v190
    %v192 = vsel %vm178, %v191, %v174
    %193 = vst [vmem:[%s3] sm:$0xff] %v192
    // Predicated region
    $region26: #{ppo_forward.1} parent=1 // pred_check
      _
    $region27: #{ppo_forward.1} parent=1 // pred_check_branch
      %195 = sbr.rel (0) target = $region29
    $region28: #{ppo_forward.1} parent=1 // pred_region
      _
    $region29: #{ppo_forward.1} parent=1 // pred_fallthru
      _
    // Predicated region
    $region30: #{ppo_forward.1} parent=1 // pred_check
      _
    $region31: #{ppo_forward.1} parent=1 // pred_check_branch
      %197 = sbr.rel (0) target = $region33
    $region32: #{ppo_forward.1} parent=1 // pred_region
      _
    $region33: #{ppo_forward.1} parent=1 // pred_fallthru
      _
    %198 = vsyncpa [#allocation3], 1
    %199 = vsyncpa [#allocation5], 1

</llo_original>
